<compile_context>
chip_gen: v5e
topology: v5e:2x2
jax: 0.10.0
libtpu: 0.0.40
codegen_flags: <defaults>
</compile_context>

<pallas_src>
import jax
import jax.numpy as jnp
from jax.experimental import pallas as pl
from jax.experimental.pallas import tpu as pltpu

_NEG_BIG = -1e30  # large finite negative: exp(NEG_BIG - m) == 0 in f32


def _round_up(x: int, m: int) -> int:
    return ((x + m - 1) // m) * m


# ---------------------------------------------------------------------------
# Pallas kernel: one row-tile of  softmax(x @ W^T + b)
#   x_ref : (TM, K)        input rows
#   w_ref : (K, E_pad)     W^T, zero-padded expert columns  (VMEM-resident)
#   b_ref : (1, E_pad)     bias, padded columns = -1e30     (VMEM-resident)
#   o_ref : (TM, E)        softmax probabilities at true expert width
# ---------------------------------------------------------------------------
def _gating_kernel(x_ref, w_ref, b_ref, o_ref):
    # Linear: x @ W^T + b  (MXU, f32 accumulation). Padded columns end up at
    # -1e30 because their W columns are 0 and their bias entries are -1e30.
    logits = jnp.dot(x_ref[...], w_ref[...], preferred_element_type=jnp.float32)
    logits = logits + b_ref[...].astype(jnp.float32)

    # Numerically stable softmax over the last (lane) dim.
    m = jnp.max(logits, axis=-1, keepdims=True)
    p = jnp.exp(logits - m)                       # padded cols -> exactly 0
    denom = jnp.sum(p, axis=-1, keepdims=True)
    inv = 1.0 / denom                             # exact reciprocal (1e-5 tol)
    probs = p * inv

    # Store only the true expert columns (narrow writeback).
    num_experts = o_ref.shape[-1]
    o_ref[...] = probs[:, :num_experts].astype(o_ref.dtype)


# ---------------------------------------------------------------------------
# One-time parameter prep (hoisted out of the per-call forward):
#   weight: (num_experts, input_dim)  [PyTorch nn.Linear layout]
#   bias  : (num_experts,)
# Returns W^T padded to a lane-dense (K, E_pad) and bias padded with -1e30.
# ---------------------------------------------------------------------------
def prepare_gating_params(weight, bias):
    num_experts, _ = weight.shape
    e_pad = _round_up(num_experts, 128)
    w_t = jnp.pad(weight.T.astype(jnp.float32),
                  ((0, 0), (0, e_pad - num_experts)))
    b_p = jnp.pad(bias.reshape(1, -1).astype(jnp.float32),
                  ((0, 0), (0, e_pad - num_experts)),
                  constant_values=_NEG_BIG)
    return w_t, b_p


# ---------------------------------------------------------------------------
# Forward: y = softmax(x @ W^T + b, axis=-1)
# ---------------------------------------------------------------------------
def gating_network_forward(x, w_t, b_p, num_experts, *, tm: int = 512):
    """x: (..., input_dim); w_t/b_p from prepare_gating_params."""
    orig_shape = x.shape
    in_dim = orig_shape[-1]
    e_pad = w_t.shape[-1]

    x2 = x.reshape(-1, in_dim)
    n = x2.shape[0]

    # Row tile: sublane-aligned, clamped for tiny inputs, but small enough to
    # give >= 2 grid steps when possible (keeps both v7x TensorCores busy).
    tm_eff = min(tm, _round_up(n, 8))
    if n > 8 and pl.cdiv(n, tm_eff) < 2:
        tm_eff = _round_up(pl.cdiv(n, 2), 8)
    grid = (pl.cdiv(n, tm_eff),)   # ragged last block handled by Pallas

    out = pl.pallas_call(
        _gating_kernel,
        out_shape=jax.ShapeDtypeStruct((n, num_experts), jnp.float32),
        grid=grid,
        in_specs=[
            # streaming row tiles of x
            pl.BlockSpec((tm_eff, in_dim), lambda i: (i, 0)),
            # weight / bias: constant index_map -> DMA'd once, VMEM-resident
            pl.BlockSpec((in_dim, e_pad), lambda i: (0, 0)),
            pl.BlockSpec((1, e_pad), lambda i: (0, 0)),
        ],
        # Output at true expert width (full-dim last block -> legal); OOB rows
        # of the last partial block are discarded on writeback.
        out_specs=pl.BlockSpec((tm_eff, num_experts), lambda i: (i, 0)),
        compiler_params=pltpu.CompilerParams(
            dimension_semantics=("parallel",),    # shard rows across TCs (v7x)
            vmem_limit_bytes=32 * 1024 * 1024,
        ),
    )(x2, w_t, b_p)

    return out.reshape(*orig_shape[:-1], num_experts)


def reference_forward(x, weight, bias):
    return jax.nn.softmax(jnp.einsum("...k,ek->...e", x, weight) + bias, axis=-1)


# ---------------------------------------------------------------------------
if __name__ == "__main__":
    BATCH, SEQ, INPUT_DIM, NUM_EXPERTS = 2, 8, 32, 8

    key = jax.random.PRNGKey(0)
    key, kx, kw, kb = jax.random.split(key, 4)

    x = jax.random.normal(kx, (BATCH, SEQ, INPUT_DIM), jnp.float32)

    # PyTorch nn.Linear default init range: U(-1/sqrt(fan_in), 1/sqrt(fan_in))
    bound = 1.0 / float(INPUT_DIM) ** 0.5
    weight = jax.random.uniform(kw, (NUM_EXPERTS, INPUT_DIM), jnp.float32,
                                -bound, bound)
    bias = jax.random.uniform(kb, (NUM_EXPERTS,), jnp.float32, -bound, bound)

    w_t, b_p = prepare_gating_params(weight, bias)   # hoisted, one-time prep
    out = gating_network_forward(x, w_t, b_p, NUM_EXPERTS)
    out = jax.block_until_ready(out)

    ref = reference_forward(x, weight, bias)
    assert out.shape == (BATCH, SEQ, NUM_EXPERTS), out.shape
    assert jnp.allclose(out, ref, atol=1e-5, rtol=1e-5), "mismatch vs reference"
    assert jnp.allclose(out.sum(-1), jnp.ones((BATCH, SEQ)), atol=1e-5), \
        "softmax rows must sum to 1"

    print("KERNEL_OK")
</pallas_src>

<mosaic_0001>
module attributes {stable_mosaic.version = 11 : i64} {
  func.func @_gating_kernel(%arg0: i32, %arg1: memref<8x32xf32, #tpu.memory_space<vmem>>, %arg2: memref<32x128xf32, #tpu.memory_space<vmem>>, %arg3: memref<1x128xf32, #tpu.memory_space<vmem>>, %arg4: memref<8x8xf32, #tpu.memory_space<vmem>>) attributes {dimension_semantics = [#tpu.dimension_semantics<parallel>], iteration_bounds = array<i64: 2>, scalar_prefetch = 0 : i64, scratch_operands = 0 : i64, tpu.core_type = #tpu.core_type<tc>, window_params = [{transform_indices = @transform_0, window_bounds = array<i64: 8, 32>}, {pipeline_mode = #tpu.pipeline_mode<synchronous>, transform_indices = @transform_1, window_bounds = array<i64: 32, 128>}, {pipeline_mode = #tpu.pipeline_mode<synchronous>, transform_indices = @transform_2, window_bounds = array<i64: 1, 128>}, {transform_indices = @transform_3, window_bounds = array<i64: 8, 8>}]} {
    %c0 = arith.constant 0 : index
    %c0_0 = arith.constant 0 : index
    %0 = vector.load %arg1[%c0, %c0_0] : memref<8x32xf32, #tpu.memory_space<vmem>>, vector<8x32xf32>
    %c0_1 = arith.constant 0 : index
    %c0_2 = arith.constant 0 : index
    %1 = vector.load %arg2[%c0_1, %c0_2] : memref<32x128xf32, #tpu.memory_space<vmem>>, vector<32x128xf32>
    %cst = arith.constant dense<0.000000e+00> : vector<8x128xf32>
    %2 = tpu.matmul %0, %1, %cst {dimension_numbers = #tpu.dot_dimension_numbers<[1], [0], [0], [1], [0, 0, 1, 1], [], []>} : vector<8x32xf32>, vector<32x128xf32>, vector<8x128xf32> -> vector<8x128xf32>
    %c0_3 = arith.constant 0 : index
    %c0_4 = arith.constant 0 : index
    %3 = vector.load %arg3[%c0_3, %c0_4] : memref<1x128xf32, #tpu.memory_space<vmem>>, vector<1x128xf32>
    %4 = vector.broadcast %3 : vector<1x128xf32> to vector<8x128xf32>
    %5 = arith.addf %2, %4 : vector<8x128xf32>
    %cst_5 = arith.constant dense<0xFF800000> : vector<8xf32>
    %6 = vector.multi_reduction <maximumf>, %5, %cst_5 [1] : vector<8x128xf32> to vector<8xf32>
    %7 = vector.shape_cast %6 : vector<8xf32> to vector<8x1xf32>
    %8 = vector.broadcast %7 : vector<8x1xf32> to vector<8x128xf32>
    %9 = arith.subf %5, %8 : vector<8x128xf32>
    %10 = math.exp %9 : vector<8x128xf32>
    %cst_6 = arith.constant dense<0.000000e+00> : vector<8xf32>
    %11 = vector.multi_reduction <add>, %10, %cst_6 [1] : vector<8x128xf32> to vector<8xf32>
    %12 = vector.shape_cast %11 : vector<8xf32> to vector<8x1xf32>
    %cst_7 = arith.constant 1.000000e+00 : f32
    %13 = vector.broadcast %cst_7 : f32 to vector<8x1xf32>
    %14 = arith.divf %13, %12 : vector<8x1xf32>
    %15 = vector.broadcast %14 : vector<8x1xf32> to vector<8x128xf32>
    %16 = arith.mulf %10, %15 : vector<8x128xf32>
    %17 = vector.extract_strided_slice %16 {offsets = [0, 0], sizes = [8, 8], strides = [1, 1]} : vector<8x128xf32> to vector<8x8xf32>
    %c0_8 = arith.constant 0 : index
    %c0_9 = arith.constant 0 : index
    %18 = vector.load %arg4[%c0_8, %c0_9] : memref<8x8xf32, #tpu.memory_space<vmem>>, vector<8x8xf32>
    tpu.vector_store %arg4[%c0_8, %c0_9], %17 {strides = array<i32>} : memref<8x8xf32, #tpu.memory_space<vmem>>, vector<8x8xf32>,
    return
  }
  func.func @transform_0(%arg0: i32) -> (i32, i32) {
    %c0_i32 = arith.constant 0 : i32
    %c0_i32_0 = arith.constant 0 : i32
    return %arg0, %c0_i32 : i32, i32
  }
  func.func @transform_1(%arg0: i32) -> (i32, i32) {
    %c0_i32 = arith.constant 0 : i32
    %c0_i32_0 = arith.constant 0 : i32
    %c0_i32_1 = arith.constant 0 : i32
    return %c0_i32, %c0_i32_0 : i32, i32
  }
  func.func @transform_2(%arg0: i32) -> (i32, i32) {
    %c0_i32 = arith.constant 0 : i32
    %c0_i32_0 = arith.constant 0 : i32
    %c0_i32_1 = arith.constant 0 : i32
    return %c0_i32, %c0_i32_0 : i32, i32
  }
  func.func @transform_3(%arg0: i32) -> (i32, i32) {
    %c0_i32 = arith.constant 0 : i32
    %c0_i32_0 = arith.constant 0 : i32
    return %arg0, %c0_i32 : i32, i32
  }
}

</mosaic_0001>

<llo_original>
// kernel: tpu_custom_call.1
$region0: #{tpu_custom_call.1}
  #allocation0 [shape = 'u32[]', space=smem, size = 0x4, offset = 0x4, fixed_abs, tag = 'smem constant byte address 0x4 - core index']
  #allocation1 [shape = 'u32[72,128]{1,0:T(1,128)}', space=vmem, size = 0x9000, scoped, tag = 'internal scratch']
  %s0 = inlined_call_operand.hbm [shape: f32[16,32], index: 0, kind: input, shape index: {}]
  %s1 = inlined_call_operand.hbm [shape: f32[32,128], index: 1, kind: input, shape index: {}]
  %s2 = inlined_call_operand.vmem [shape: f32[1,128], index: 2, kind: input, shape index: {}]
  %s3 = inlined_call_operand.vmem [shape: f32[16,8], index: 3, kind: output, shape index: {}]
  %s4 = sld [smem:[#allocation0]]
  $region53: #{tpu_custom_call.1} parent=0
    _
  %s6 = ssub.s32 1, %s4
  %s7 = scalar_select 0, %s6, %s4
  $region1: #{tpu_custom_call.1} parent=0
    #allocation2 [shape = 'u8[8192]{0}', space=vmem, size = 0x2000, scoped, tag = 'input window, operand 0']
    #allocation3 [shape = 's32[2]{0}', space=sflag, size = 0x8, scoped, tag = 'scoped memory for tpu_custom_call.1']
    #allocation4 [shape = 'u8[16384]{0}', space=vmem, size = 0x4000, scoped, tag = 'input window, operand 1, single buffered']
    #allocation5 [shape = 's32[1]{0}', space=sflag, size = 0x4, scoped, tag = 'scoped memory for tpu_custom_call.1']
    %8 = vsyncpa [#allocation3], 0
    %s9 = scalar_lea.sflag [#allocation3], 1
    %10 = vsyncpa %s9, 0
    %11 = vsyncpa [#allocation5], 0
    loop: start=0, step=1, limit=4
    $region2: #{tpu_custom_call.1} parent=1 // loop_pre_header
      _
    $region3: #{tpu_custom_call.1} parent=1 // loop_header
      %s13 = sphi 0, %s17
      %p14 = scmp.ge.s32.totalorder %s13, 4
      %s23 = sphi 0, %s25
      %s26 = sphi 0, %s23
      %s27 = sphi 0, %s26
      %s43 = sphi 0, %s27
      %s47 = sphi 0, %s47
      %s49 = sphi 0, %s47
      %s50 = sphi 0, %s49
      %s64 = sphi 0, %s50
      %s68 = sphi 0, %s68
      %s70 = sphi 0, %s68
      %s71 = sphi 0, %s70
      %s85 = sphi 0, %s71
      %s91 = sphi 0, %s93
      %s94 = sphi 0, %s91
      %s95 = sphi 0, %s94
      %s111 = sphi 0, %s95
    $region4: #{tpu_custom_call.1} parent=1 // loop_header_branch
      %16 = sbr.rel (%p14) target = $region8
    $region5: #{tpu_custom_call.1} parent=1 // loop_body
      %s18 = ssub.s32 %s13, 1
      %s19 = ssub.s32 %s13, 2
      %s20 = sadd.s32 %s13, 1
      %s21 = ssub.s32 %s13, %s20
      %p22 = scmp.eq.s32.totalorder %s21, 0
      %s24 = sadd.s32 %s23, 1
      %s25 = scalar_select %p22, %s23, %s24
      %p28 = pneg %p22
      %p29 = scmp.eq.s32.totalorder %s13, 1
      %p30 = por %p28, %p29
      %p31 = scmp.ne.s32.totalorder %s23, %s26
      %p32 = scmp.eq.s32.totalorder %s13, 0
      %p33 = por %p31, %p32
      %p34 = scmp.ne.s32.totalorder %s23, %s26
      %p35 = scmp.eq.s32.totalorder %s18, 1
      %p36 = por %p34, %p35
      %p37 = scmp.ne.s32.totalorder %s26, %s27
      %p38 = scmp.eq.s32.totalorder %s18, 0
      %p39 = por %p37, %p38
      %p40 = scmp.ne.s32.totalorder %s26, %s27
      %p41 = scmp.eq.s32.totalorder %s19, 1
      %p42 = por %p40, %p41
      %p44 = scmp.ne.s32.totalorder %s27, %s43
      %p45 = scmp.eq.s32.totalorder %s19, 0
      %p46 = por %p44, %p45
      %s48 = sadd.s32 %s47, 1
      %p51 = scmp.eq.s32.totalorder %s13, 1
      %p52 = scmp.ne.s32.totalorder %s47, %s49
      %p53 = scmp.eq.s32.totalorder %s13, 0
      %p54 = por %p52, %p53
      %p55 = scmp.ne.s32.totalorder %s47, %s49
      %p56 = scmp.eq.s32.totalorder %s18, 1
      %p57 = por %p55, %p56
      %p58 = scmp.ne.s32.totalorder %s49, %s50
      %p59 = scmp.eq.s32.totalorder %s18, 0
      %p60 = por %p58, %p59
      %p61 = scmp.ne.s32.totalorder %s49, %s50
      %p62 = scmp.eq.s32.totalorder %s19, 1
      %p63 = por %p61, %p62
      %p65 = scmp.ne.s32.totalorder %s50, %s64
      %p66 = scmp.eq.s32.totalorder %s19, 0
      %p67 = por %p65, %p66
      %s69 = sadd.s32 %s68, 1
      %p72 = scmp.eq.s32.totalorder %s13, 1
      %p73 = scmp.ne.s32.totalorder %s68, %s70
      %p74 = scmp.eq.s32.totalorder %s13, 0
      %p75 = por %p73, %p74
      %p76 = scmp.ne.s32.totalorder %s68, %s70
      %p77 = scmp.eq.s32.totalorder %s18, 1
      %p78 = por %p76, %p77
      %p79 = scmp.ne.s32.totalorder %s70, %s71
      %p80 = scmp.eq.s32.totalorder %s18, 0
      %p81 = por %p79, %p80
      %p82 = scmp.ne.s32.totalorder %s70, %s71
      %p83 = scmp.eq.s32.totalorder %s19, 1
      %p84 = por %p82, %p83
      %p86 = scmp.ne.s32.totalorder %s71, %s85
      %p87 = scmp.eq.s32.totalorder %s19, 0
      %p88 = por %p86, %p87
      %s89 = ssub.s32 %s13, %s20
      %p90 = scmp.eq.s32.totalorder %s89, 0
      %s92 = sadd.s32 %s91, 1
      %s93 = scalar_select %p90, %s91, %s92
      %p96 = pneg %p90
      %p97 = scmp.eq.s32.totalorder %s13, 1
      %p98 = por %p96, %p97
      %p99 = scmp.ne.s32.totalorder %s91, %s94
      %p100 = scmp.eq.s32.totalorder %s13, 0
      %p101 = por %p99, %p100
      %p102 = scmp.ne.s32.totalorder %s91, %s94
      %p103 = scmp.eq.s32.totalorder %s18, 1
      %p104 = por %p102, %p103
      %p105 = scmp.ne.s32.totalorder %s94, %s95
      %p106 = scmp.eq.s32.totalorder %s18, 0
      %p107 = por %p105, %p106
      %p108 = scmp.ne.s32.totalorder %s94, %s95
      %p109 = scmp.eq.s32.totalorder %s19, 1
      %p110 = por %p108, %p109
      %p112 = scmp.ne.s32.totalorder %s95, %s111
      %p113 = scmp.eq.s32.totalorder %s19, 0
      %p114 = por %p112, %p113
      %p115 = scmp.le.s32.totalorder 1, %s13
      %p116 = scmp.lt.s32.totalorder %s13, 3
      %p117 = pnand %p115, %p116
      %p118 = pneg %p117
      // Predicated region
      $region9: #{tpu_custom_call.1} parent=5 // pred_check
        _
      $region10: #{tpu_custom_call.1} parent=5 // pred_check_branch
        %120 = sbr.rel (%p117) target = $region12
      $region11: #{tpu_custom_call.1} parent=5 // pred_region
        %s121 = ssub.s32 %s13, 1
        // Predicated region
        $region13: #{tpu_custom_call.1} parent=11 // pred_check
          %p122 = pneg %p60
        $region14: #{tpu_custom_call.1} parent=11 // pred_check_branch
          %124 = sbr.rel (%p122) target = $region16
        $region15: #{tpu_custom_call.1} parent=11 // pred_region
          %126 = vsyncadd [#allocation5], 0
          %s127 = sshll.u32 %s1, 4
          %s128 = int_to_ptr.hbm [resolvable:$true] %s127
          %s129 = sshll.u32 [#allocation4], 4
          %s130 = int_to_ptr.vmem [resolvable:$true] %s129
          %135 = dma.hbm_to_vmem [thread:$0]  %s128, 512, %s130, [#allocation5], 128, 128, 8
        $region16: #{tpu_custom_call.1} parent=11 // pred_fallthru
          _
        // Predicated region
        $region17: #{tpu_custom_call.1} parent=11 // pred_check
          %p136 = pneg %p81
        $region18: #{tpu_custom_call.1} parent=11 // pred_check_branch
          %138 = sbr.rel (%p136) target = $region20
        $region19: #{tpu_custom_call.1} parent=11 // pred_region
          _
        $region20: #{tpu_custom_call.1} parent=11 // pred_fallthru
          _
      $region12: #{tpu_custom_call.1} parent=5 // pred_fallthru
        _
      %p139 = scmp.lt.s32.totalorder %s13, 2
      // Predicated region
      $region21: #{tpu_custom_call.1} parent=5 // pred_check
        %p140 = pneg %p139
      $region22: #{tpu_custom_call.1} parent=5 // pred_check_branch
        %142 = sbr.rel (%p140) target = $region24
      $region23: #{tpu_custom_call.1} parent=5 // pred_region
        // Predicated region
        $region25: #{tpu_custom_call.1} parent=23 // pred_check
          %p143 = pneg %p33
        $region26: #{tpu_custom_call.1} parent=23 // pred_check_branch
          %145 = sbr.rel (%p143) target = $region28
        $region27: #{tpu_custom_call.1} parent=23 // pred_region
          %s146 = sand.u32 %s23, 1
          %s147 = scalar_lea.sflag [#allocation3], %s146
          %s148 = sand.u32 %s23, 1
          %s149 = smul.addr %s148, 8
          %s150 = scalar_lea.vmem [#allocation2], %s149
          %152 = vsyncadd %s147, 0
          %s153 = smul.addr %s13, 8
          %s154 = scalar_lea.hbm %s0, %s153
          %s156 = sshll.u32 %s154, 4
          %s157 = int_to_ptr.hbm [resolvable:$true] %s156
          %s158 = sshll.u32 %s150, 4
          %s159 = int_to_ptr.vmem [resolvable:$true] %s158
          %161 = dma.hbm_to_vmem [thread:$0]  %s157, 128, %s159, %s147
        $region28: #{tpu_custom_call.1} parent=23 // pred_fallthru
          _
      $region24: #{tpu_custom_call.1} parent=5 // pred_fallthru
        _
      %p162 = scmp.le.s32.totalorder 1, %s13
      %p163 = scmp.lt.s32.totalorder %s13, 3
      %p164 = pnand %p162, %p163
      %p165 = pneg %p164
      // Predicated region
      $region29: #{tpu_custom_call.1} parent=5 // pred_check
        _
      $region30: #{tpu_custom_call.1} parent=5 // pred_check_branch
        %167 = sbr.rel (%p164) target = $region32
      $region31: #{tpu_custom_call.1} parent=5 // pred_region
        %s168 = ssub.s32 %s13, 1
        %s169 = sand.u32 %s26, 1
        %s170 = scalar_lea.sflag [#allocation3], %s169
        %s171 = sand.u32 %s26, 1
        %s172 = smul.addr %s171, 8
        %s173 = scalar_lea.vmem [#allocation2], %s172
        // Predicated region
        $region33: #{tpu_custom_call.1} parent=31 // pred_check
          %p174 = pneg %p39
        $region34: #{tpu_custom_call.1} parent=31 // pred_check_branch
          %176 = sbr.rel (%p174) target = $region36
        $region35: #{tpu_custom_call.1} parent=31 // pred_region
          %178 = dma.done %s170, 128
        $region36: #{tpu_custom_call.1} parent=31 // pred_fallthru
          _
        // Predicated region
        $region37: #{tpu_custom_call.1} parent=31 // pred_check
          %p179 = pneg %p60
        $region38: #{tpu_custom_call.1} parent=31 // pred_check_branch
          %181 = sbr.rel (%p179) target = $region40
        $region39: #{tpu_custom_call.1} parent=31 // pred_region
          %183 = dma.done [#allocation5], 512
        $region40: #{tpu_custom_call.1} parent=31 // pred_fallthru
          _
        %s184 = sand.u32 %s26, 1
        %s185 = scalar_lea.sflag [#allocation3], %s184
        %s186 = sand.u32 %s26, 1
        %s187 = smul.addr %s186, 8
        %s188 = scalar_lea.vmem [#allocation2], %s187
        %p189 = pneg %p39
        %p190 = pneg %p36
        %p191 = pneg %p60
        %p192 = pneg %p57
        %p193 = pneg %p81
        %p194 = pneg %p78
        %p195 = pneg %p107
        %p196 = pneg %p104
        %p197 = scmp.lt.s32.totalorder %s18, 1
        %s198 = scalar_select %p197, %s18, 1
        %s199 = smul.addr %s198, 8
        %s200 = scalar_lea.vmem %s3, %s199
        %p201 = scmp.lt.s32.totalorder %s18, 1
        %s202 = scalar_select %p201, %s18, 1
        %s203 = smul.addr %s202, 8
        %s204 = scalar_lea.vmem %s3, %s203
        %v205 = vld [vmem:[%s173] sm:$0xff]
        %v206 = vld [vmem:[#allocation4] sm:$0xff]
        %v207 = vld [vmem:[#allocation4 + $0x8] sm:$0xff]
        %v208 = vld [vmem:[#allocation4 + $0x10] sm:$0xff]
        %v209 = vld [vmem:[#allocation4 + $0x18] sm:$0xff]
        %v210 = vld [vmem:[%s2] sm:$0x1]
        %v212 = vperm.slane %v210, 0
        %vm214 = vcmask 261120
        %v216 = vsel %vm214, %v205, 0
        %218 = vmatpush.msra.mxu0 0.0
        %219 = vmatpush.msra.mxu0 0.0
        %220 = vmatpush.msra.mxu0 0.0
        %221 = vmatpush.msra.mxu0 0.0
        %222 = vmatpush.msra.mxu0 0.0
        %223 = vmatpush.msra.mxu0 0.0
        %224 = vmatpush.msra.mxu0 0.0
        %225 = vmatpush.msra.mxu0 0.0
        %226 = vmatpush.msra.mxu0 0.0
        %227 = vmatpush.msra.mxu0 0.0
        %228 = vmatpush.msra.mxu0 0.0
        %229 = vmatpush.msra.mxu0 0.0
        %230 = vmatpush.msra.mxu0 %v209
        %231 = vmatpush.msra.mxu0 %v208
        %232 = vmatpush.msra.mxu0 %v207
        %233 = vmatpush.msra.mxu0 %v206
        %234 = vmatmul.f32.gmra.mxu0 %v216
        %v235 = vpop.f32.mrf.mxu0
        %v236 = vadd.f32 %v212, %v235
        %237 = vdwg.mxu0
        %238 = vmax.xlane.f32.xlu0 %v236
        %v239 = vpop.xlane.xlu0 %238
        %v240 = vsub.f32 %v236, %v239
        %v241 = vmul.f32 %v240, 1.442695
        %v242 = vpow.pop %v241
        %243 = vadd.xlane.f32.xlu0 %v242
        %v244 = vpop.xlane.xlu0 %243
        %v245 = vrcp.pop %v244
        %v246 = vmul.f32 %v244, %v245
        %v247 = vsub.f32 1.0, %v246
        %v248 = vmul.f32 %v245, %v247
        %v249 = vadd.f32 %v245, %v248
        %vm250 = vweird.f32 %v244
        %vm251 = vweird.f32 %v245
        %vm252 = vmor %vm250, %vm251
        %v253 = vsel %vm252, %v245, %v249
        %v254 = vand.u32 2147483647, %v244
        %vm255 = vcmp.eq.f32.partialorder %v254, 8.507059e+37
        %v256 = vand.u32 %v244, 2147483648
        %v257 = vor.u32 1.1754944e-38, %v256
        %v258 = vsel %vm255, %v257, %v253
        %v259 = vmul.f32 1.0, %v258
        %v260 = vmul.f32 %v242, %v259
        %vm261 = vcmask 64512
        %262 = vst.msk [vmem:[%s204] sm:$0xff] %vm261, %v260
        %p263 = scmp.lt.s32.totalorder %s18, 1
        %s264 = scalar_select %p263, %s18, 1
        %s265 = smul.addr %s264, 8
        %s266 = scalar_lea.vmem %s3, %s265
        // Predicated region
        $region41: #{tpu_custom_call.1} parent=31 // pred_check
          %p267 = pneg %p104
        $region42: #{tpu_custom_call.1} parent=31 // pred_check_branch
          %269 = sbr.rel (%p267) target = $region44
        $region43: #{tpu_custom_call.1} parent=31 // pred_region
          _
        $region44: #{tpu_custom_call.1} parent=31 // pred_fallthru
          _
      $region32: #{tpu_custom_call.1} parent=5 // pred_fallthru
        _
      %p270 = scmp.le.s32.totalorder 2, %s13
      // Predicated region
      $region45: #{tpu_custom_call.1} parent=5 // pred_check
        %p271 = pneg %p270
      $region46: #{tpu_custom_call.1} parent=5 // pred_check_branch
        %273 = sbr.rel (%p271) target = $region48
      $region47: #{tpu_custom_call.1} parent=5 // pred_region
        %s274 = ssub.s32 %s13, 2
        // Predicated region
        $region49: #{tpu_custom_call.1} parent=47 // pred_check
          %p275 = pneg %p110
        $region50: #{tpu_custom_call.1} parent=47 // pred_check_branch
          %277 = sbr.rel (%p275) target = $region52
        $region51: #{tpu_custom_call.1} parent=47 // pred_region
          %p278 = scmp.lt.s32.totalorder %s19, 1
          %s279 = scalar_select %p278, %s19, 1
          %s280 = smul.addr %s279, 8
          %s281 = scalar_lea.vmem %s3, %s280
        $region52: #{tpu_custom_call.1} parent=47 // pred_fallthru
          _
      $region48: #{tpu_custom_call.1} parent=5 // pred_fallthru
        _
    $region6: #{tpu_custom_call.1} parent=1 // loop_footer
      %s17 = sadd.s32 1, %s13
    $region7: #{tpu_custom_call.1} parent=1 // loop_footer_branch
      %12 = sbr.rel target = $region3
    $region8: #{tpu_custom_call.1} parent=1 // loop_exit
      _
    %282 = vsyncpa [#allocation3], 1
    %s283 = scalar_lea.sflag [#allocation3], 1
    %284 = vsyncpa %s283, 1
    %285 = vsyncpa [#allocation5], 1

</llo_original>
